<compile_context>
chip_gen: v6e
topology: v6e:2x2x1
jax: 0.10.0
libtpu: 0.0.40
codegen_flags: <defaults>
</compile_context>

<pallas_src>
import functools
import math

import jax
import jax.numpy as jnp
from jax.experimental import pallas as pl
from jax.experimental.pallas import tpu as pltpu


ACT_DTYPE = jnp.bfloat16      # activation dtype between kernels (MXU input)
W_DTYPE = jnp.bfloat16        # matmul weight dtype (MXU input)


def _select_hw_config():
    """Per-generation tile sizes and scoped-VMEM limit."""
    tile_m, tile_n, tile_k = 512, 256, 1024
    vmem_limit = 64 * 1024 * 1024          # v5e/v6e have 128 MiB physical VMEM
    vmem_cap = None
    try:
        vmem_cap = getattr(pltpu.get_tpu_info(), "vmem_capacity_bytes", None)
    except Exception:
        vmem_cap = None
    try:
        kind = jax.devices()[0].device_kind.lower()
    except Exception:
        kind = ""
    if (vmem_cap is not None and vmem_cap <= 64 * 1024 * 1024) or "v7" in kind:
        # v7x: only 64 MiB physical VMEM per TC -> keep the scoped limit low
        # so double-buffered tiles still fit with pipelining.
        vmem_limit = 48 * 1024 * 1024
    if "v5e" in kind or "v5 lite" in kind or "v5lite" in kind:
        # v5e: 4x128x128 MXU -> 128-wide output tiles map exactly onto it.
        tile_n = 128
    return tile_m, tile_n, tile_k, vmem_limit


TILE_M_PREF, TILE_N_PREF, TILE_K_PREF, VMEM_LIMIT_BYTES = _select_hw_config()
TILE_Q_PREF = 256             # attention q-tile


def _pick_tile(dim, pref, mult):
    """Largest tile <= pref that divides dim and is a multiple of `mult`,
    falling back to the full dimension (always legal per BlockSpec rules)."""
    if dim <= pref:
        return dim
    t = (pref // mult) * mult
    while t >= mult:
        if dim % t == 0:
            return t
        t -= mult
    return dim


# ------------------------- Pallas kernels -------------------------

def _linear_kernel(x_ref, w_ref, b_ref, o_ref, acc_ref):
    # grid = (M/tm, N/tn, K/tk); K is the ("arbitrary") reduction axis.
    k = pl.program_id(2)

    @pl.when(k == 0)
    def _():
        acc_ref[...] = jnp.zeros_like(acc_ref)

    acc_ref[...] += jnp.dot(x_ref[...], w_ref[...],
                            preferred_element_type=jnp.float32)

    @pl.when(k == pl.num_programs(2) - 1)
    def _():
        y = acc_ref[...] + b_ref[...].astype(jnp.float32)
        o_ref[...] = y.astype(o_ref.dtype)


def linear(x, w, b, out_dtype=None):
    M, K = x.shape
    _, N = w.shape
    out_dtype = x.dtype if out_dtype is None else out_dtype
    tm = _pick_tile(M, TILE_M_PREF, 16)
    tn = _pick_tile(N, TILE_N_PREF, 128)
    tk = _pick_tile(K, TILE_K_PREF, 128)
    return pl.pallas_call(
        _linear_kernel,
        out_shape=jax.ShapeDtypeStruct((M, N), out_dtype),
        grid=(M // tm, N // tn, K // tk),
        in_specs=[
            pl.BlockSpec((tm, tk), lambda i, j, k: (i, k)),
            pl.BlockSpec((tk, tn), lambda i, j, k: (k, j)),
            pl.BlockSpec((1, tn), lambda i, j, k: (0, j)),
        ],
        out_specs=pl.BlockSpec((tm, tn), lambda i, j, k: (i, j)),
        scratch_shapes=[pltpu.VMEM((tm, tn), jnp.float32)],
        compiler_params=pltpu.CompilerParams(
            dimension_semantics=("parallel", "parallel", "arbitrary"),
            vmem_limit_bytes=VMEM_LIMIT_BYTES),
    )(x, w, b.reshape(1, N))


def _linear_res_ln_kernel(x_ref, w_ref, b_ref, res_ref, g_ref, beta_ref,
                          o_ref, acc_ref, *, eps):
    # Fused: out = LayerNorm(x @ W + b + residual).  N (=hidden) is kept
    # un-tiled so the LN reduction sees the full feature dim.
    k = pl.program_id(1)

    @pl.when(k == 0)
    def _():
        acc_ref[...] = jnp.zeros_like(acc_ref)

    acc_ref[...] += jnp.dot(x_ref[...], w_ref[...],
                            preferred_element_type=jnp.float32)

    @pl.when(k == pl.num_programs(1) - 1)
    def _():
        h = (acc_ref[...] + b_ref[...].astype(jnp.float32)
             + res_ref[...].astype(jnp.float32))
        mean = jnp.mean(h, axis=-1, keepdims=True)
        var = jnp.mean(jnp.square(h - mean), axis=-1, keepdims=True)
        inv = jax.lax.rsqrt(var + eps)
        y = ((h - mean) * inv) * g_ref[...].astype(jnp.float32) \
            + beta_ref[...].astype(jnp.float32)
        o_ref[...] = y.astype(o_ref.dtype)


def linear_res_ln(x, w, b, residual, gamma, beta, eps=1e-12):
    M, K = x.shape
    _, N = w.shape
    tm = _pick_tile(M, TILE_M_PREF, 16)
    tk = _pick_tile(K, TILE_K_PREF, 128)
    kernel = functools.partial(_linear_res_ln_kernel, eps=eps)
    return pl.pallas_call(
        kernel,
        out_shape=jax.ShapeDtypeStruct((M, N), residual.dtype),
        grid=(M // tm, K // tk),
        in_specs=[
            pl.BlockSpec((tm, tk), lambda i, k: (i, k)),
            pl.BlockSpec((tk, N), lambda i, k: (k, 0)),
            pl.BlockSpec((1, N), lambda i, k: (0, 0)),
            pl.BlockSpec((tm, N), lambda i, k: (i, 0)),
            pl.BlockSpec((1, N), lambda i, k: (0, 0)),
            pl.BlockSpec((1, N), lambda i, k: (0, 0)),
        ],
        out_specs=pl.BlockSpec((tm, N), lambda i, k: (i, 0)),
        scratch_shapes=[pltpu.VMEM((tm, N), jnp.float32)],
        compiler_params=pltpu.CompilerParams(
            dimension_semantics=("parallel", "arbitrary"),
            vmem_limit_bytes=VMEM_LIMIT_BYTES),
    )(x, w, b.reshape(1, N), residual, gamma.reshape(1, N),
      beta.reshape(1, N))


def _ffn_res_ln_kernel(x_ref, wi_ref, bi_ref, wo2_ref, bo2_ref, res_ref,
                       g_ref, beta_ref, o_ref, acc_ref, *, eps):
    # Fused FFN: out = LN(gelu(x @ Wi + bi) @ Wo2 + bo2 + residual).
    # grid = (M/tm, I/ti); the [tm, ti] intermediate never leaves VMEM.
    j = pl.program_id(1)

    @pl.when(j == 0)
    def _():
        acc_ref[...] = jnp.zeros_like(acc_ref)

    inter = jnp.dot(x_ref[...], wi_ref[...],
                    preferred_element_type=jnp.float32)
    inter = inter + bi_ref[...].astype(jnp.float32)
    # TODO(synk): HF BERT uses erf-gelu; tanh approximation used here.
    inter = jax.nn.gelu(inter, approximate=True)
    acc_ref[...] += jnp.dot(inter.astype(x_ref.dtype), wo2_ref[...],
                            preferred_element_type=jnp.float32)

    @pl.when(j == pl.num_programs(1) - 1)
    def _():
        h = (acc_ref[...] + bo2_ref[...].astype(jnp.float32)
             + res_ref[...].astype(jnp.float32))
        mean = jnp.mean(h, axis=-1, keepdims=True)
        var = jnp.mean(jnp.square(h - mean), axis=-1, keepdims=True)
        inv = jax.lax.rsqrt(var + eps)
        y = ((h - mean) * inv) * g_ref[...].astype(jnp.float32) \
            + beta_ref[...].astype(jnp.float32)
        o_ref[...] = y.astype(o_ref.dtype)


def ffn_res_ln(x, wi, bi, wo2, bo2, residual, gamma, beta, eps=1e-12):
    M, H = x.shape
    _, I = wi.shape
    tm = _pick_tile(M, TILE_M_PREF, 16)
    ti = _pick_tile(I, TILE_K_PREF, 128)
    kernel = functools.partial(_ffn_res_ln_kernel, eps=eps)
    return pl.pallas_call(
        kernel,
        out_shape=jax.ShapeDtypeStruct((M, H), residual.dtype),
        grid=(M // tm, I // ti),
        in_specs=[
            pl.BlockSpec((tm, H), lambda i, j: (i, 0)),     # x (revisited over j)
            pl.BlockSpec((H, ti), lambda i, j: (0, j)),     # Wi block
            pl.BlockSpec((1, ti), lambda i, j: (0, j)),     # bi block
            pl.BlockSpec((ti, H), lambda i, j: (j, 0)),     # Wo2 block
            pl.BlockSpec((1, H), lambda i, j: (0, 0)),      # bo2
            pl.BlockSpec((tm, H), lambda i, j: (i, 0)),     # residual
            pl.BlockSpec((1, H), lambda i, j: (0, 0)),      # gamma
            pl.BlockSpec((1, H), lambda i, j: (0, 0)),      # beta
        ],
        out_specs=pl.BlockSpec((tm, H), lambda i, j: (i, 0)),
        scratch_shapes=[pltpu.VMEM((tm, H), jnp.float32)],
        compiler_params=pltpu.CompilerParams(
            dimension_semantics=("parallel", "arbitrary"),
            vmem_limit_bytes=VMEM_LIMIT_BYTES),
    )(x, wi, bi.reshape(1, I), wo2, bo2.reshape(1, H), residual,
      gamma.reshape(1, H), beta.reshape(1, H))


def _embed_ln_kernel(word_ref, pos_ref, type_ref, g_ref, b_ref, o_ref, *, eps):
    # Fused embedding add (word + pos + type) + LayerNorm; no pre-LN f32
    # activation is materialized in HBM.
    h = (word_ref[0].astype(jnp.float32)
         + pos_ref[...].astype(jnp.float32)
         + type_ref[...].astype(jnp.float32))
    mean = jnp.mean(h, axis=-1, keepdims=True)
    var = jnp.mean(jnp.square(h - mean), axis=-1, keepdims=True)
    inv = jax.lax.rsqrt(var + eps)
    y = ((h - mean) * inv) * g_ref[...].astype(jnp.float32) \
        + b_ref[...].astype(jnp.float32)
    o_ref[0] = y.astype(o_ref.dtype)


def embed_add_ln(word, pos, type_row, gamma, beta, out_dtype, eps=1e-12):
    B, S, H = word.shape
    kernel = functools.partial(_embed_ln_kernel, eps=eps)
    return pl.pallas_call(
        kernel,
        out_shape=jax.ShapeDtypeStruct((B, S, H), out_dtype),
        grid=(B,),
        in_specs=[
            pl.BlockSpec((1, S, H), lambda b: (b, 0, 0)),
            pl.BlockSpec((S, H), lambda b: (0, 0)),
            pl.BlockSpec((1, H), lambda b: (0, 0)),
            pl.BlockSpec((1, H), lambda b: (0, 0)),
            pl.BlockSpec((1, H), lambda b: (0, 0)),
        ],
        out_specs=pl.BlockSpec((1, S, H), lambda b: (b, 0, 0)),
        compiler_params=pltpu.CompilerParams(
            dimension_semantics=("parallel",),
            vmem_limit_bytes=VMEM_LIMIT_BYTES),
    )(word, pos, type_row.reshape(1, H), gamma.reshape(1, H),
      beta.reshape(1, H))


def _attention_kernel(q_ref, k_ref, v_ref, o_ref, ctx_ref, *, num_heads,
                      head_dim, scale):
    # Blocks: q [1, tq, H]; k, v [1, S, H]; out [1, tq, H].
    # Per-head results are streamed into the f32 VMEM scratch at static lane
    # offsets (one head live at a time; no terminal concatenate).
    # TODO(synk): no attention / padding mask (matches the reference call);
    # no flash-style KV tiling (full [tq, S] scores per head in VMEM);
    # head slices are dh-wide (sub-128-lane) within the H-wide tile.
    q = q_ref[0]                                          # [tq, H] bf16
    k = k_ref[0]                                          # [S, H]  bf16
    v = v_ref[0]                                          # [S, H]  bf16
    for h in range(num_heads):
        sl = slice(h * head_dim, (h + 1) * head_dim)
        qh = q[:, sl]
        kh = k[:, sl]
        vh = v[:, sl]
        s = jax.lax.dot_general(
            qh, kh, (((1,), (1,)), ((), ())),
            preferred_element_type=jnp.float32) * scale   # [tq, S] f32
        m = jnp.max(s, axis=-1, keepdims=True)
        p = jnp.exp(s - m)
        p = p * pl.reciprocal(jnp.sum(p, axis=-1, keepdims=True), approx=True)
        ctx_ref[:, sl] = jnp.dot(p.astype(vh.dtype), vh,
                                 preferred_element_type=jnp.float32)
    o_ref[0] = ctx_ref[...].astype(o_ref.dtype)


def attention(qkv, num_heads, head_dim):
    # qkv: [B, S, 3H] (fused Q|K|V).  Grid = (batch, q-tiles), both parallel
    # (fills both v7x TensorCores even at B=1); K/V blocks are revisited
    # across q-tiles so they are only DMA'd when the batch index changes.
    B, S, H3 = qkv.shape
    H = num_heads * head_dim
    tq = _pick_tile(S, TILE_Q_PREF, 8)
    scale = 1.0 / math.sqrt(head_dim)
    kernel = functools.partial(_attention_kernel, num_heads=num_heads,
                               head_dim=head_dim, scale=scale)
    return pl.pallas_call(
        kernel,
        out_shape=jax.ShapeDtypeStruct((B, S, H), qkv.dtype),
        grid=(B, S // tq),
        in_specs=[
            pl.BlockSpec((1, tq, H), lambda b, qi: (b, qi, 0)),   # Q tile
            pl.BlockSpec((1, S, H), lambda b, qi: (b, 0, 1)),     # K (full S)
            pl.BlockSpec((1, S, H), lambda b, qi: (b, 0, 2)),     # V (full S)
        ],
        out_specs=pl.BlockSpec((1, tq, H), lambda b, qi: (b, qi, 0)),
        scratch_shapes=[pltpu.VMEM((tq, H), jnp.float32)],
        compiler_params=pltpu.CompilerParams(
            dimension_semantics=("parallel", "parallel"),
            vmem_limit_bytes=VMEM_LIMIT_BYTES),
    )(qkv, qkv, qkv)


def _ce_loss_kernel(logits_ref, labels_ref, o_ref, *, num_classes):
    # CrossEntropyLoss(ignore_index=-1, reduction='mean'); the one-hot is
    # built in-kernel from integer labels with broadcasted_iota, and the
    # lane-padded (>= num_classes) logit columns are masked out.
    logits = logits_ref[...].astype(jnp.float32)            # [M, Cpad]
    labels = labels_ref[...]                                # [M, 1] int32
    M, Cpad = logits.shape
    class_ids = jax.lax.broadcasted_iota(jnp.int32, (M, Cpad), 1)
    logits = jnp.where(class_ids < num_classes, logits, jnp.float32(-1e30))
    m = jnp.max(logits, axis=-1, keepdims=True)
    lse = m + jnp.log(jnp.sum(jnp.exp(logits - m), axis=-1, keepdims=True))
    safe_labels = jnp.where(labels < 0, 0, labels)
    onehot = (class_ids == safe_labels).astype(jnp.float32)
    tgt_logit = jnp.sum(onehot * logits, axis=-1, keepdims=True)
    mask = (labels >= 0).astype(jnp.float32)
    total = jnp.sum((lse - tgt_logit) * mask)
    count = jnp.maximum(jnp.sum(mask), 1.0)
    o_ref[...] = (total / count) * jnp.ones((1, 1), jnp.float32)


def ce_loss(logits_padded, labels, num_classes):
    # Loss input is [B*S, Cpad] with small Cpad -> single block is fine even
    # at realistic B*S; the encoder dominates.
    kernel = functools.partial(_ce_loss_kernel, num_classes=num_classes)
    return pl.pallas_call(
        kernel,
        out_shape=jax.ShapeDtypeStruct((1, 1), jnp.float32),
        in_specs=[pl.BlockSpec(memory_space=pltpu.MemorySpace.VMEM)] * 2,
        out_specs=pl.BlockSpec(memory_space=pltpu.MemorySpace.VMEM),
    )(logits_padded, labels)


# ------------------------- parameter setup (glue) -------------------------

def init_params(key, cfg):
    H = cfg["hidden_size"]
    I = cfg["intermediate_size"]
    V = cfg["vocab_size"]
    P = cfg["max_position"]
    C = cfg["class_num"]
    L = cfg["num_layers"]
    r, alpha = 8, 32            # LoraConfig(r=8, lora_alpha=32)
    lora_scale = alpha / r

    keys = iter(jax.random.split(key, 16 + L * 24))

    def nrm(shape, std=0.02):
        return std * jax.random.normal(next(keys), shape, dtype=jnp.float32)

    params = {"cfg": cfg}
    params["emb"] = {
        "word": nrm((V, H)),
        "pos": nrm((P, H)),
        "type": nrm((2, H)),
        "ln_g": jnp.ones((H,), jnp.float32),
        "ln_b": jnp.zeros((H,), jnp.float32),
    }

    def lora_merged_weight():
        # base weight stored [in, out]; LoRA A:[r,in], B:[out,r]; merge delta.
        w = nrm((H, H))
        a = nrm((r, H))
        b = nrm((H, r))
        return w + lora_scale * (b @ a).T

    layers = []
    for _ in range(L):
        wq = lora_merged_weight()
        wk = lora_merged_weight()
        wv = lora_merged_weight()
        layers.append({
            # Fused QKV projection weight [H, 3H].
            "w_qkv": jnp.concatenate([wq, wk, wv], axis=1).astype(W_DTYPE),
            "b_qkv": jnp.zeros((3 * H,), jnp.float32),
            "wo": nrm((H, H)).astype(W_DTYPE),
            "bo": jnp.zeros((H,), jnp.float32),
            "ln1_g": jnp.ones((H,), jnp.float32),
            "ln1_b": jnp.zeros((H,), jnp.float32),
            "wi": nrm((H, I)).astype(W_DTYPE),
            "bi": jnp.zeros((I,), jnp.float32),
            "wo2": nrm((I, H)).astype(W_DTYPE),
            "bo2": jnp.zeros((H,), jnp.float32),
            "ln2_g": jnp.ones((H,), jnp.float32),
            "ln2_b": jnp.zeros((H,), jnp.float32),
        })
    params["layers"] = layers

    # Classify head padded to a lane-dense (multiple-of-128) class dim.
    C_pad = max(128, ((C + 127) // 128) * 128)
    cls_w = jnp.zeros((H, C_pad), jnp.float32).at[:, :C].set(nrm((H, C)))
    params["cls_w"] = cls_w.astype(W_DTYPE)
    params["cls_b"] = jnp.zeros((C_pad,), jnp.float32)
    params["class_pad"] = C_pad
    return params


# ------------------------- forward pass -------------------------

def torch_model_forward(params, token_ids, target=None):
    cfg = params["cfg"]
    B, S = token_ids.shape
    H = cfg["hidden_size"]
    nH = cfg["num_heads"]
    dh = H // nH
    C = cfg["class_num"]

    # --- BERT embeddings (gather is glue; add + layernorm is one kernel) ---
    emb = params["emb"]
    word = emb["word"][token_ids]                     # [B, S, H] f32 gather
    pos = emb["pos"][:S]                              # [S, H]
    type_row = emb["type"][0]                         # token_type_ids == 0
    x = embed_add_ln(word, pos, type_row, emb["ln_g"], emb["ln_b"],
                     out_dtype=ACT_DTYPE)             # [B, S, H]
    x2d = x.reshape(B * S, H)

    # --- transformer encoder layers ---
    for layer in params["layers"]:
        qkv = linear(x2d, layer["w_qkv"], layer["b_qkv"])            # [B*S, 3H]
        ctx = attention(qkv.reshape(B, S, 3 * H), nH, dh)            # [B, S, H]
        x2d = linear_res_ln(ctx.reshape(B * S, H), layer["wo"], layer["bo"],
                            x2d, layer["ln1_g"], layer["ln1_b"])
        x2d = ffn_res_ln(x2d, layer["wi"], layer["bi"],
                         layer["wo2"], layer["bo2"],
                         x2d, layer["ln2_g"], layer["ln2_b"])

    # --- classify head (f32 emissions, lane-dense padded columns) ---
    logits_pad = linear(x2d, params["cls_w"], params["cls_b"],
                        out_dtype=jnp.float32)                       # [B*S, Cpad]
    predict = logits_pad[:, :C].reshape(B, S, C)

    if target is None:
        # use_crf=False inference: return per-token emissions.
        # TODO(synk): CRF Viterbi decode path (use_crf=True) not implemented.
        return predict

    # use_crf=False training path: CrossEntropyLoss(ignore_index=-1)
    labels = target.reshape(-1, 1).astype(jnp.int32)
    loss = ce_loss(logits_pad, labels, C)
    return loss[0, 0]


# ------------------------- demo -------------------------

if __name__ == "__main__":
    cfg = dict(
        hidden_size=128,        # lane-aligned small demo size
        num_heads=4,
        num_layers=2,
        intermediate_size=512,
        vocab_size=30,
        max_position=16,
        max_length=8,
        class_num=9,
    )
    key = jax.random.PRNGKey(0)
    pkey, xkey, tkey = jax.random.split(key, 3)

    params = init_params(pkey, cfg)

    B, S = 2, cfg["max_length"]
    token_ids = jax.random.randint(xkey, (B, S), 0, cfg["vocab_size"])
    target = jax.random.randint(tkey, (B, S), -1, cfg["class_num"])

    predict = torch_model_forward(params, token_ids)                 # [B, S, class_num]
    loss = torch_model_forward(params, token_ids, target=target)     # scalar CE loss

    jax.block_until_ready((predict, loss))
    assert predict.shape == (B, S, cfg["class_num"])
    assert loss.shape == ()
    assert jnp.isfinite(loss)
    print("KERNEL_OK")
</pallas_src>

<mosaic_0001>
module attributes {stable_mosaic.version = 11 : i64} {
  func.func @_embed_ln_kernel(%arg0: i32, %arg1: memref<1x8x128xf32, #tpu.memory_space<vmem>>, %arg2: memref<8x128xf32, #tpu.memory_space<vmem>>, %arg3: memref<1x128xf32, #tpu.memory_space<vmem>>, %arg4: memref<1x128xf32, #tpu.memory_space<vmem>>, %arg5: memref<1x128xf32, #tpu.memory_space<vmem>>, %arg6: memref<1x8x128xbf16, #tpu.memory_space<vmem>>) attributes {dimension_semantics = [#tpu.dimension_semantics<parallel>], iteration_bounds = array<i64: 2>, scalar_prefetch = 0 : i64, scratch_operands = 0 : i64, tpu.core_type = #tpu.core_type<tc>, window_params = [{transform_indices = @transform_0, window_bounds = array<i64: 1, 8, 128>}, {pipeline_mode = #tpu.pipeline_mode<synchronous>, transform_indices = @transform_1, window_bounds = array<i64: 8, 128>}, {pipeline_mode = #tpu.pipeline_mode<synchronous>, transform_indices = @transform_2, window_bounds = array<i64: 1, 128>}, {pipeline_mode = #tpu.pipeline_mode<synchronous>, transform_indices = @transform_3, window_bounds = array<i64: 1, 128>}, {pipeline_mode = #tpu.pipeline_mode<synchronous>, transform_indices = @transform_4, window_bounds = array<i64: 1, 128>}, {transform_indices = @transform_5, window_bounds = array<i64: 1, 8, 128>}]} {
    %c0 = arith.constant 0 : index
    %c0_0 = arith.constant 0 : index
    %c0_1 = arith.constant 0 : index
    %0 = vector.load %arg1[%c0, %c0_0, %c0_1] : memref<1x8x128xf32, #tpu.memory_space<vmem>>, vector<1x8x128xf32>
    %1 = vector.shape_cast %0 : vector<1x8x128xf32> to vector<8x128xf32>
    %c0_2 = arith.constant 0 : index
    %c0_3 = arith.constant 0 : index
    %2 = vector.load %arg2[%c0_2, %c0_3] : memref<8x128xf32, #tpu.memory_space<vmem>>, vector<8x128xf32>
    %3 = arith.addf %1, %2 : vector<8x128xf32>
    %c0_4 = arith.constant 0 : index
    %c0_5 = arith.constant 0 : index
    %4 = vector.load %arg3[%c0_4, %c0_5] : memref<1x128xf32, #tpu.memory_space<vmem>>, vector<1x128xf32>
    %5 = vector.broadcast %4 : vector<1x128xf32> to vector<8x128xf32>
    %6 = arith.addf %3, %5 : vector<8x128xf32>
    %cst = arith.constant dense<0.000000e+00> : vector<8xf32>
    %7 = vector.multi_reduction <add>, %6, %cst [1] : vector<8x128xf32> to vector<8xf32>
    %8 = vector.shape_cast %7 : vector<8xf32> to vector<8x1xf32>
    %cst_6 = arith.constant 1.280000e+02 : f32
    %9 = vector.broadcast %cst_6 : f32 to vector<8x1xf32>
    %10 = arith.divf %8, %9 : vector<8x1xf32>
    %11 = vector.broadcast %10 : vector<8x1xf32> to vector<8x128xf32>
    %12 = arith.subf %6, %11 : vector<8x128xf32>
    %13 = arith.mulf %12, %12 : vector<8x128xf32>
    %cst_7 = arith.constant dense<0.000000e+00> : vector<8xf32>
    %14 = vector.multi_reduction <add>, %13, %cst_7 [1] : vector<8x128xf32> to vector<8xf32>
    %15 = vector.shape_cast %14 : vector<8xf32> to vector<8x1xf32>
    %cst_8 = arith.constant 1.280000e+02 : f32
    %16 = vector.broadcast %cst_8 : f32 to vector<8x1xf32>
    %17 = arith.divf %15, %16 : vector<8x1xf32>
    %cst_9 = arith.constant 9.99999996E-13 : f32
    %18 = vector.broadcast %cst_9 : f32 to vector<8x1xf32>
    %19 = arith.addf %17, %18 : vector<8x1xf32>
    %20 = math.rsqrt %19 : vector<8x1xf32>
    %21 = vector.broadcast %10 : vector<8x1xf32> to vector<8x128xf32>
    %22 = arith.subf %6, %21 : vector<8x128xf32>
    %23 = vector.broadcast %20 : vector<8x1xf32> to vector<8x128xf32>
    %24 = arith.mulf %22, %23 : vector<8x128xf32>
    %c0_10 = arith.constant 0 : index
    %c0_11 = arith.constant 0 : index
    %25 = vector.load %arg4[%c0_10, %c0_11] : memref<1x128xf32, #tpu.memory_space<vmem>>, vector<1x128xf32>
    %26 = vector.broadcast %25 : vector<1x128xf32> to vector<8x128xf32>
    %27 = arith.mulf %24, %26 : vector<8x128xf32>
    %c0_12 = arith.constant 0 : index
    %c0_13 = arith.constant 0 : index
    %28 = vector.load %arg5[%c0_12, %c0_13] : memref<1x128xf32, #tpu.memory_space<vmem>>, vector<1x128xf32>
    %29 = vector.broadcast %28 : vector<1x128xf32> to vector<8x128xf32>
    %30 = arith.addf %27, %29 : vector<8x128xf32>
    %31 = arith.truncf %30 : vector<8x128xf32> to vector<8x128xbf16>
    %c0_14 = arith.constant 0 : index
    %c0_15 = arith.constant 0 : index
    %c0_16 = arith.constant 0 : index
    %32 = vector.load %arg6[%c0_14, %c0_15, %c0_16] : memref<1x8x128xbf16, #tpu.memory_space<vmem>>, vector<1x8x128xbf16>
    %33 = vector.shape_cast %32 : vector<1x8x128xbf16> to vector<8x128xbf16>
    %34 = vector.shape_cast %31 : vector<8x128xbf16> to vector<1x8x128xbf16>
    tpu.vector_store %arg6[%c0_14, %c0_15, %c0_16], %34 {strides = array<i32>} : memref<1x8x128xbf16, #tpu.memory_space<vmem>>, vector<1x8x128xbf16>,
    return
  }
  func.func @transform_0(%arg0: i32) -> (i32, i32, i32) {
    %c0_i32 = arith.constant 0 : i32
    %c0_i32_0 = arith.constant 0 : i32
    %c0_i32_1 = arith.constant 0 : i32
    return %arg0, %c0_i32, %c0_i32_0 : i32, i32, i32
  }
  func.func @transform_1(%arg0: i32) -> (i32, i32) {
    %c0_i32 = arith.constant 0 : i32
    %c0_i32_0 = arith.constant 0 : i32
    %c0_i32_1 = arith.constant 0 : i32
    return %c0_i32, %c0_i32_0 : i32, i32
  }
  func.func @transform_2(%arg0: i32) -> (i32, i32) {
    %c0_i32 = arith.constant 0 : i32
    %c0_i32_0 = arith.constant 0 : i32
    %c0_i32_1 = arith.constant 0 : i32
    return %c0_i32, %c0_i32_0 : i32, i32
  }
  func.func @transform_3(%arg0: i32) -> (i32, i32) {
    %c0_i32 = arith.constant 0 : i32
    %c0_i32_0 = arith.constant 0 : i32
    %c0_i32_1 = arith.constant 0 : i32
    return %c0_i32, %c0_i32_0 : i32, i32
  }
  func.func @transform_4(%arg0: i32) -> (i32, i32) {
    %c0_i32 = arith.constant 0 : i32
    %c0_i32_0 = arith.constant 0 : i32
    %c0_i32_1 = arith.constant 0 : i32
    return %c0_i32, %c0_i32_0 : i32, i32
  }
  func.func @transform_5(%arg0: i32) -> (i32, i32, i32) {
    %c0_i32 = arith.constant 0 : i32
    %c0_i32_0 = arith.constant 0 : i32
    %c0_i32_1 = arith.constant 0 : i32
    return %arg0, %c0_i32, %c0_i32_0 : i32, i32, i32
  }
}

</mosaic_0001>

<llo_original>
// kernel: tpu_custom_call.1
$region0: #{tpu_custom_call.1}
  #allocation0 [shape = 'u32[]', space=smem, size = 0x4, offset = 0x4, fixed_abs, tag = 'smem constant byte address 0x4 - core index']
  #allocation1 [shape = 'u32[144,128]{1,0:T(1,128)}', space=vmem, size = 0x12000, scoped, tag = 'internal scratch']
  %s0 = inlined_call_operand.hbm [shape: f32[2,8,128], index: 0, kind: input, shape index: {}]
  %s1 = inlined_call_operand.hbm [shape: f32[8,128], index: 1, kind: input, shape index: {}]
  %s2 = inlined_call_operand.vmem [shape: f32[1,128], index: 2, kind: input, shape index: {}]
  %s3 = inlined_call_operand.vmem [shape: f32[1,128], index: 3, kind: input, shape index: {}]
  %s4 = inlined_call_operand.vmem [shape: f32[1,128], index: 4, kind: input, shape index: {}]
  %s5 = inlined_call_operand.hbm [shape: bf16[2,8,128], index: 5, kind: output, shape index: {}]
  %s6 = sld [smem:[#allocation0]]
  $region61: #{tpu_custom_call.1} parent=0
    _
  %s8 = ssub.s32 1, %s6
  %s9 = scalar_select 0, %s8, %s6
  $region1: #{tpu_custom_call.1} parent=0
    #allocation2 [shape = 'u8[8192]{0}', space=vmem, size = 0x2000, scoped, tag = 'input window, operand 0']
    #allocation3 [shape = 's32[2]{0}', space=sflag, size = 0x8, scoped, tag = 'scoped memory for tpu_custom_call.1']
    #allocation4 [shape = 's32[2]{0}', space=sflag, size = 0x8, scoped, tag = 'scoped memory for tpu_custom_call.1']
    #allocation5 [shape = 'u8[4096]{0}', space=vmem, size = 0x1000, scoped, tag = 'input window, operand 1, single buffered']
    #allocation6 [shape = 's32[1]{0}', space=sflag, size = 0x4, scoped, tag = 'scoped memory for tpu_custom_call.1']
    #allocation7 [shape = 'u8[4096]{0}', space=vmem, size = 0x1000, scoped, tag = 'output window, operand 0']
    %10 = vsyncpa [#allocation3], 0
    %s11 = scalar_lea.sflag [#allocation3], 1
    %12 = vsyncpa %s11, 0
    %13 = vsyncpa [#allocation6], 0
    %14 = vsyncpa [#allocation4], 0
    %s15 = scalar_lea.sflag [#allocation4], 1
    %16 = vsyncpa %s15, 0
    loop: start=0, step=1, limit=4
    $region2: #{tpu_custom_call.1} parent=1 // loop_pre_header
      _
    $region3: #{tpu_custom_call.1} parent=1 // loop_header
      %s18 = sphi 0, %s22
      %p19 = scmp.ge.s32.totalorder %s18, 4
      %s28 = sphi 0, %s30
      %s31 = sphi 0, %s28
      %s32 = sphi 0, %s31
      %s48 = sphi 0, %s32
      %s52 = sphi 0, %s52
      %s54 = sphi 0, %s52
      %s55 = sphi 0, %s54
      %s69 = sphi 0, %s55
      %s73 = sphi 0, %s73
      %s75 = sphi 0, %s73
      %s76 = sphi 0, %s75
      %s90 = sphi 0, %s76
      %s94 = sphi 0, %s94
      %s96 = sphi 0, %s94
      %s97 = sphi 0, %s96
      %s111 = sphi 0, %s97
      %s115 = sphi 0, %s115
      %s117 = sphi 0, %s115
      %s118 = sphi 0, %s117
      %s132 = sphi 0, %s118
      %s138 = sphi 0, %s140
      %s141 = sphi 0, %s138
      %s142 = sphi 0, %s141
      %s158 = sphi 0, %s142
    $region4: #{tpu_custom_call.1} parent=1 // loop_header_branch
      %21 = sbr.rel (%p19) target = $region8
    $region5: #{tpu_custom_call.1} parent=1 // loop_body
      %s23 = ssub.s32 %s18, 1
      %s24 = ssub.s32 %s18, 2
      %s25 = sadd.s32 %s18, 1
      %s26 = ssub.s32 %s18, %s25
      %p27 = scmp.eq.s32.totalorder %s26, 0
      %s29 = sadd.s32 %s28, 1
      %s30 = scalar_select %p27, %s28, %s29
      %p33 = pneg %p27
      %p34 = scmp.eq.s32.totalorder %s18, 1
      %p35 = por %p33, %p34
      %p36 = scmp.ne.s32.totalorder %s28, %s31
      %p37 = scmp.eq.s32.totalorder %s18, 0
      %p38 = por %p36, %p37
      %p39 = scmp.ne.s32.totalorder %s28, %s31
      %p40 = scmp.eq.s32.totalorder %s23, 1
      %p41 = por %p39, %p40
      %p42 = scmp.ne.s32.totalorder %s31, %s32
      %p43 = scmp.eq.s32.totalorder %s23, 0
      %p44 = por %p42, %p43
      %p45 = scmp.ne.s32.totalorder %s31, %s32
      %p46 = scmp.eq.s32.totalorder %s24, 1
      %p47 = por %p45, %p46
      %p49 = scmp.ne.s32.totalorder %s32, %s48
      %p50 = scmp.eq.s32.totalorder %s24, 0
      %p51 = por %p49, %p50
      %s53 = sadd.s32 %s52, 1
      %p56 = scmp.eq.s32.totalorder %s18, 1
      %p57 = scmp.ne.s32.totalorder %s52, %s54
      %p58 = scmp.eq.s32.totalorder %s18, 0
      %p59 = por %p57, %p58
      %p60 = scmp.ne.s32.totalorder %s52, %s54
      %p61 = scmp.eq.s32.totalorder %s23, 1
      %p62 = por %p60, %p61
      %p63 = scmp.ne.s32.totalorder %s54, %s55
      %p64 = scmp.eq.s32.totalorder %s23, 0
      %p65 = por %p63, %p64
      %p66 = scmp.ne.s32.totalorder %s54, %s55
      %p67 = scmp.eq.s32.totalorder %s24, 1
      %p68 = por %p66, %p67
      %p70 = scmp.ne.s32.totalorder %s55, %s69
      %p71 = scmp.eq.s32.totalorder %s24, 0
      %p72 = por %p70, %p71
      %s74 = sadd.s32 %s73, 1
      %p77 = scmp.eq.s32.totalorder %s18, 1
      %p78 = scmp.ne.s32.totalorder %s73, %s75
      %p79 = scmp.eq.s32.totalorder %s18, 0
      %p80 = por %p78, %p79
      %p81 = scmp.ne.s32.totalorder %s73, %s75
      %p82 = scmp.eq.s32.totalorder %s23, 1
      %p83 = por %p81, %p82
      %p84 = scmp.ne.s32.totalorder %s75, %s76
      %p85 = scmp.eq.s32.totalorder %s23, 0
      %p86 = por %p84, %p85
      %p87 = scmp.ne.s32.totalorder %s75, %s76
      %p88 = scmp.eq.s32.totalorder %s24, 1
      %p89 = por %p87, %p88
      %p91 = scmp.ne.s32.totalorder %s76, %s90
      %p92 = scmp.eq.s32.totalorder %s24, 0
      %p93 = por %p91, %p92
      %s95 = sadd.s32 %s94, 1
      %p98 = scmp.eq.s32.totalorder %s18, 1
      %p99 = scmp.ne.s32.totalorder %s94, %s96
      %p100 = scmp.eq.s32.totalorder %s18, 0
      %p101 = por %p99, %p100
      %p102 = scmp.ne.s32.totalorder %s94, %s96
      %p103 = scmp.eq.s32.totalorder %s23, 1
      %p104 = por %p102, %p103
      %p105 = scmp.ne.s32.totalorder %s96, %s97
      %p106 = scmp.eq.s32.totalorder %s23, 0
      %p107 = por %p105, %p106
      %p108 = scmp.ne.s32.totalorder %s96, %s97
      %p109 = scmp.eq.s32.totalorder %s24, 1
      %p110 = por %p108, %p109
      %p112 = scmp.ne.s32.totalorder %s97, %s111
      %p113 = scmp.eq.s32.totalorder %s24, 0
      %p114 = por %p112, %p113
      %s116 = sadd.s32 %s115, 1
      %p119 = scmp.eq.s32.totalorder %s18, 1
      %p120 = scmp.ne.s32.totalorder %s115, %s117
      %p121 = scmp.eq.s32.totalorder %s18, 0
      %p122 = por %p120, %p121
      %p123 = scmp.ne.s32.totalorder %s115, %s117
      %p124 = scmp.eq.s32.totalorder %s23, 1
      %p125 = por %p123, %p124
      %p126 = scmp.ne.s32.totalorder %s117, %s118
      %p127 = scmp.eq.s32.totalorder %s23, 0
      %p128 = por %p126, %p127
      %p129 = scmp.ne.s32.totalorder %s117, %s118
      %p130 = scmp.eq.s32.totalorder %s24, 1
      %p131 = por %p129, %p130
      %p133 = scmp.ne.s32.totalorder %s118, %s132
      %p134 = scmp.eq.s32.totalorder %s24, 0
      %p135 = por %p133, %p134
      %s136 = ssub.s32 %s18, %s25
      %p137 = scmp.eq.s32.totalorder %s136, 0
      %s139 = sadd.s32 %s138, 1
      %s140 = scalar_select %p137, %s138, %s139
      %p143 = pneg %p137
      %p144 = scmp.eq.s32.totalorder %s18, 1
      %p145 = por %p143, %p144
      %p146 = scmp.ne.s32.totalorder %s138, %s141
      %p147 = scmp.eq.s32.totalorder %s18, 0
      %p148 = por %p146, %p147
      %p149 = scmp.ne.s32.totalorder %s138, %s141
      %p150 = scmp.eq.s32.totalorder %s23, 1
      %p151 = por %p149, %p150
      %p152 = scmp.ne.s32.totalorder %s141, %s142
      %p153 = scmp.eq.s32.totalorder %s23, 0
      %p154 = por %p152, %p153
      %p155 = scmp.ne.s32.totalorder %s141, %s142
      %p156 = scmp.eq.s32.totalorder %s24, 1
      %p157 = por %p155, %p156
      %p159 = scmp.ne.s32.totalorder %s142, %s158
      %p160 = scmp.eq.s32.totalorder %s24, 0
      %p161 = por %p159, %p160
      %p162 = scmp.le.s32.totalorder 1, %s18
      %p163 = scmp.lt.s32.totalorder %s18, 3
      %p164 = pnand %p162, %p163
      %p165 = pneg %p164
      // Predicated region
      $region9: #{tpu_custom_call.1} parent=5 // pred_check
        _
      $region10: #{tpu_custom_call.1} parent=5 // pred_check_branch
        %167 = sbr.rel (%p164) target = $region12
      $region11: #{tpu_custom_call.1} parent=5 // pred_region
        %s168 = ssub.s32 %s18, 1
        // Predicated region
        $region13: #{tpu_custom_call.1} parent=11 // pred_check
          %p169 = pneg %p65
        $region14: #{tpu_custom_call.1} parent=11 // pred_check_branch
          %171 = sbr.rel (%p169) target = $region16
        $region15: #{tpu_custom_call.1} parent=11 // pred_region
          %s173 = ssub.s32 128, 128
          %174 = vsyncadd [#allocation6], %s173
          %s176 = sshll.u32 [#allocation5], 4
          %s177 = int_to_ptr.vmem [resolvable:$true] %s176
          %179 = dma.hbm_to_vmem [thread:$0]  %s1, 128, %s177, [#allocation6]
        $region16: #{tpu_custom_call.1} parent=11 // pred_fallthru
          _
        // Predicated region
        $region17: #{tpu_custom_call.1} parent=11 // pred_check
          %p180 = pneg %p86
        $region18: #{tpu_custom_call.1} parent=11 // pred_check_branch
          %182 = sbr.rel (%p180) target = $region20
        $region19: #{tpu_custom_call.1} parent=11 // pred_region
          _
        $region20: #{tpu_custom_call.1} parent=11 // pred_fallthru
          _
        // Predicated region
        $region21: #{tpu_custom_call.1} parent=11 // pred_check
          %p183 = pneg %p107
        $region22: #{tpu_custom_call.1} parent=11 // pred_check_branch
          %185 = sbr.rel (%p183) target = $region24
        $region23: #{tpu_custom_call.1} parent=11 // pred_region
          _
        $region24: #{tpu_custom_call.1} parent=11 // pred_fallthru
          _
        // Predicated region
        $region25: #{tpu_custom_call.1} parent=11 // pred_check
          %p186 = pneg %p128
        $region26: #{tpu_custom_call.1} parent=11 // pred_check_branch
          %188 = sbr.rel (%p186) target = $region28
        $region27: #{tpu_custom_call.1} parent=11 // pred_region
          _
        $region28: #{tpu_custom_call.1} parent=11 // pred_fallthru
          _
      $region12: #{tpu_custom_call.1} parent=5 // pred_fallthru
        _
      %p189 = scmp.lt.s32.totalorder %s18, 2
      // Predicated region
      $region29: #{tpu_custom_call.1} parent=5 // pred_check
        %p190 = pneg %p189
      $region30: #{tpu_custom_call.1} parent=5 // pred_check_branch
        %192 = sbr.rel (%p190) target = $region32
      $region31: #{tpu_custom_call.1} parent=5 // pred_region
        // Predicated region
        $region33: #{tpu_custom_call.1} parent=31 // pred_check
          %p193 = pneg %p38
        $region34: #{tpu_custom_call.1} parent=31 // pred_check_branch
          %195 = sbr.rel (%p193) target = $region36
        $region35: #{tpu_custom_call.1} parent=31 // pred_region
          %s196 = sand.u32 %s28, 1
          %s197 = scalar_lea.sflag [#allocation3], %s196
          %s198 = sand.u32 %s28, 1
          %s199 = smul.addr %s198, 8
          %s200 = scalar_lea.vmem [#allocation2], %s199
          %s202 = ssub.s32 128, 128
          %203 = vsyncadd %s197, %s202
          %s204 = smul.addr %s18, 128
          %s205 = scalar_lea.hbm %s0, %s204
          %s207 = sshll.u32 %s200, 4
          %s208 = int_to_ptr.vmem [resolvable:$true] %s207
          %210 = dma.hbm_to_vmem [thread:$0]  %s205, 128, %s208, %s197
        $region36: #{tpu_custom_call.1} parent=31 // pred_fallthru
          _
      $region32: #{tpu_custom_call.1} parent=5 // pred_fallthru
        _
      %p211 = scmp.le.s32.totalorder 1, %s18
      %p212 = scmp.lt.s32.totalorder %s18, 3
      %p213 = pnand %p211, %p212
      %p214 = pneg %p213
      // Predicated region
      $region37: #{tpu_custom_call.1} parent=5 // pred_check
        _
      $region38: #{tpu_custom_call.1} parent=5 // pred_check_branch
        %216 = sbr.rel (%p213) target = $region40
      $region39: #{tpu_custom_call.1} parent=5 // pred_region
        %s217 = ssub.s32 %s18, 1
        %s218 = sand.u32 %s31, 1
        %s219 = scalar_lea.sflag [#allocation3], %s218
        %s220 = sand.u32 %s31, 1
        %s221 = smul.addr %s220, 8
        %s222 = scalar_lea.vmem [#allocation2], %s221
        // Predicated region
        $region41: #{tpu_custom_call.1} parent=39 // pred_check
          %p223 = pneg %p44
        $region42: #{tpu_custom_call.1} parent=39 // pred_check_branch
          %225 = sbr.rel (%p223) target = $region44
        $region43: #{tpu_custom_call.1} parent=39 // pred_region
          %226 = dma.done %s219, 128
        $region44: #{tpu_custom_call.1} parent=39 // pred_fallthru
          _
        // Predicated region
        $region45: #{tpu_custom_call.1} parent=39 // pred_check
          %p227 = pneg %p65
        $region46: #{tpu_custom_call.1} parent=39 // pred_check_branch
          %229 = sbr.rel (%p227) target = $region48
        $region47: #{tpu_custom_call.1} parent=39 // pred_region
          %230 = dma.done [#allocation6], 128
        $region48: #{tpu_custom_call.1} parent=39 // pred_fallthru
          _
        %s231 = sand.u32 %s31, 1
        %s232 = scalar_lea.sflag [#allocation3], %s231
        %s233 = sand.u32 %s31, 1
        %s234 = smul.addr %s233, 8
        %s235 = scalar_lea.vmem [#allocation2], %s234
        %p236 = pneg %p44
        %p237 = pneg %p41
        %p238 = pneg %p65
        %p239 = pneg %p62
        %p240 = pneg %p86
        %p241 = pneg %p83
        %p242 = pneg %p107
        %p243 = pneg %p104
        %p244 = pneg %p128
        %p245 = pneg %p125
        %p246 = pneg %p154
        %p247 = pneg %p151
        %s248 = sand.u32 %s141, 1
        %s249 = scalar_lea.sflag [#allocation4], %s248
        %s250 = sand.u32 %s141, 1
        %s251 = smul.addr %s250, 4
        %s252 = scalar_lea.vmem [#allocation7], %s251
        %v253 = vld [vmem:[%s222] sm:$0xff]
        %v254 = vld [vmem:[#allocation5] sm:$0xff]
        %v255 = vadd.f32 %v253, %v254
        %v256 = vld [vmem:[%s2] sm:$0x1]
        %v258 = vlaneseq
        %v259 = vshrl.u32 %v258, 7
        %v260 = vsub.s32 0, %v259
        %v261 = vrot.slane %v256, %v260
        %v263 = vadd.f32 %v255, %v261
        %264 = vadd.xlane.f32.xlu0 %v263
        %v265 = vpop.xlane.xlu0 %264
        %v266 = vrcp.pop 128.0
        %v267 = vmul.f32 %v265, %v266
        %v268 = vsub.f32 %v263, %v267
        %v269 = vmul.f32 %v268, %v268
        %270 = vadd.xlane.f32.xlu0 %v269
        %v271 = vpop.xlane.xlu0 %270
        %v272 = vmul.f32 %v271, %v266
        %v273 = vadd.f32 %v272, 1e-12
        %v274 = vrsqrt.pop %v273
        %v275 = vmul.f32 %v268, %v274
        %v276 = vld [vmem:[%s3] sm:$0x1]
        %v278 = vlaneseq
        %v279 = vshrl.u32 %v278, 7
        %v280 = vsub.s32 0, %v279
        %v281 = vrot.slane %v276, %v280
        %v283 = vmul.f32 %v275, %v281
        %v284 = vld [vmem:[%s4] sm:$0x1]
        %v286 = vlaneseq
        %v287 = vshrl.u32 %v286, 7
        %v288 = vsub.s32 0, %v287
        %v289 = vrot.slane %v284, %v288
        %v291 = vadd.f32 %v283, %v289
        %v292 = vpack.c.bf16 %v291, %v291
        %293 = vst [vmem:[%s252] sm:$0xf] %v292
        %s294 = sand.u32 %s141, 1
        %s295 = scalar_lea.sflag [#allocation4], %s294
        %s296 = sand.u32 %s141, 1
        %s297 = smul.addr %s296, 4
        %s298 = scalar_lea.vmem [#allocation7], %s297
        // Predicated region
        $region49: #{tpu_custom_call.1} parent=39 // pred_check
          %p299 = pneg %p151
        $region50: #{tpu_custom_call.1} parent=39 // pred_check_branch
          %301 = sbr.rel (%p299) target = $region52
        $region51: #{tpu_custom_call.1} parent=39 // pred_region
          %s303 = ssub.s32 64, 64
          %304 = vsyncadd %s295, %s303
          %s305 = smul.addr %s23, 64
          %s306 = scalar_lea.hbm %s5, %s305
          %s308 = sshll.u32 %s298, 4
          %s309 = int_to_ptr.vmem [resolvable:$true] %s308
          %311 = dma.vmem_to_hbm [thread:$0]  %s309, 64, %s306, %s295
        $region52: #{tpu_custom_call.1} parent=39 // pred_fallthru
          _
      $region40: #{tpu_custom_call.1} parent=5 // pred_fallthru
        _
      %p312 = scmp.le.s32.totalorder 2, %s18
      // Predicated region
      $region53: #{tpu_custom_call.1} parent=5 // pred_check
        %p313 = pneg %p312
      $region54: #{tpu_custom_call.1} parent=5 // pred_check_branch
        %315 = sbr.rel (%p313) target = $region56
      $region55: #{tpu_custom_call.1} parent=5 // pred_region
        %s316 = ssub.s32 %s18, 2
        // Predicated region
        $region57: #{tpu_custom_call.1} parent=55 // pred_check
          %p317 = pneg %p157
        $region58: #{tpu_custom_call.1} parent=55 // pred_check_branch
          %319 = sbr.rel (%p317) target = $region60
        $region59: #{tpu_custom_call.1} parent=55 // pred_region
          %s320 = sand.u32 %s142, 1
          %s321 = scalar_lea.sflag [#allocation4], %s320
          %s322 = sand.u32 %s142, 1
          %s323 = smul.addr %s322, 4
          %s324 = scalar_lea.vmem [#allocation7], %s323
          %325 = dma.done %s321, 64
        $region60: #{tpu_custom_call.1} parent=55 // pred_fallthru
          _
      $region56: #{tpu_custom_call.1} parent=5 // pred_fallthru
        _
    $region6: #{tpu_custom_call.1} parent=1 // loop_footer
      %s22 = sadd.s32 1, %s18
    $region7: #{tpu_custom_call.1} parent=1 // loop_footer_branch
      %17 = sbr.rel target = $region3
    $region8: #{tpu_custom_call.1} parent=1 // loop_exit
      _
    %326 = vsyncpa [#allocation3], 1
    %s327 = scalar_lea.sflag [#allocation3], 1
    %328 = vsyncpa %s327, 1
    %329 = vsyncpa [#allocation6], 1
    %330 = vsyncpa [#allocation4], 1
    %s331 = scalar_lea.sflag [#allocation4], 1
    %332 = vsyncpa %s331, 1

</llo_original>
